<compile_context>
chip_gen: v7x
topology: tpu7x:2x2x1
jax: 0.10.0
libtpu: 0.0.40
codegen_flags: <defaults>
</compile_context>

<pallas_src>
import math

import jax
import jax.numpy as jnp
from jax.experimental import pallas as pl
from jax.experimental.pallas import tpu as pltpu


def _round_up(x: int, m: int) -> int:
    return ((x + m - 1) // m) * m


def _rnn_cell_kernel(x_ref, h_ref, wih_ref, whh_ref, thr_ref, out_ref):
    # Two accumulating MXU matmuls (bf16 operands, f32 accumulation), then a
    # threshold-compare Heaviside store. thr is (1, tn) and broadcasts over rows.
    z = jnp.dot(x_ref[...], wih_ref[...], preferred_element_type=jnp.float32)
    z = z + jnp.dot(h_ref[...], whh_ref[...], preferred_element_type=jnp.float32)
    out_ref[...] = (z >= thr_ref[...]).astype(out_ref.dtype)


def prepare_params(w_ih, w_hh, b_ih, b_hh):
    """One-time parameter prep (hoisted out of the per-step path).

    Returns:
      w_ih_t: (input_padded, hidden_padded)  bf16 = W_ih^T, K padded to 16,
              hidden (lane) dim zero-padded (>=128-multiple, 256-multiple if big).
      w_hh_t: (hidden_k_padded, hidden_padded) bf16 = W_hh^T, same padding rules.
      thr:    (1, hidden_padded) f32 threshold row = -(b_ih + b_hh); padded
              lanes get a huge positive threshold so they can never spike.
      hidden: true (unpadded) hidden size.
    """
    hidden, isz = w_ih.shape
    # Lane (output) padding: >= multiple of 128; multiple of 256 when large so
    # the lane tile never collapses to 128 for awkward sizes (e.g. 640 -> 768).
    hp = _round_up(hidden, 128)
    if hp > 256:
        hp = _round_up(hp, 256)
    # K (sublane) padding to a multiple of 16 for bf16 sublane packing.
    ip = _round_up(isz, 16)
    hk = _round_up(hidden, 16)

    w_ih_t = jnp.pad(jnp.transpose(w_ih),
                     ((0, ip - isz), (0, hp - hidden))).astype(jnp.bfloat16)
    w_hh_t = jnp.pad(jnp.transpose(w_hh),
                     ((0, hk - hidden), (0, hp - hidden))).astype(jnp.bfloat16)
    bias = (b_ih + b_hh).astype(jnp.float32)
    thr = jnp.pad(-bias, (0, hp - hidden),
                  constant_values=jnp.float32(1e30)).reshape(1, hp)
    return w_ih_t, w_hh_t, thr, hidden


def spiking_vanilla_rnn_cell(x, h, w_ih_t, w_hh_t, thr, hidden_size, *,
                             tm=256, tn=512):
    """One cell step.  x: (N, input_size), h: (N, hidden_size).

    w_ih_t / w_hh_t / thr come from prepare_params.  Returns (N, hidden_size)
    bf16 spikes (exact 0/1), directly reusable as next-step h.
    """
    n = x.shape[0]
    ip, hp = w_ih_t.shape
    hk = w_hh_t.shape[0]

    # Activations in bf16 (MXU-native); pad trailing K dims to the weights' K.
    x = x.astype(jnp.bfloat16)
    h = h.astype(jnp.bfloat16)
    if x.shape[1] != ip:
        x = jnp.pad(x, ((0, 0), (0, ip - x.shape[1])))
    if h.shape[1] != hk:
        h = jnp.pad(h, ((0, 0), (0, hk - h.shape[1])))

    # Batch tile: multiple of 16 (bf16 sublane packing); padded rows sliced off.
    tm_eff = min(tm, _round_up(n, 16))
    n_pad = _round_up(n, tm_eff)
    if n_pad != n:
        x = jnp.pad(x, ((0, n_pad - n), (0, 0)))
        h = jnp.pad(h, ((0, n_pad - n), (0, 0)))

    # Hidden (lane) tile: largest multiple of 128 (<= tn) dividing padded hidden.
    tn_eff = max(d for d in range(128, min(tn, hp) + 1, 128) if hp % d == 0)

    # Hidden OUTER, batch INNER -> weight block index constant across the inner
    # batch sweep, so the slab is DMA'd once per hidden tile, not per grid step.
    grid = (hp // tn_eff, n_pad // tm_eff)

    # VMEM budget from the actual (double-buffered) tiles + headroom; v7x-safe.
    bytes_needed = 2 * (
        tm_eff * ip * 2 + tm_eff * hk * 2     # x, h blocks (bf16)
        + ip * tn_eff * 2 + hk * tn_eff * 2   # weight blocks (bf16)
        + tn_eff * 4                          # threshold row (f32)
        + tm_eff * tn_eff * 2                 # output block (bf16)
    )
    vmem_limit = min(64 * 1024 * 1024,
                     max(32 * 1024 * 1024, int(bytes_needed * 1.5) + (4 << 20)))

    out = pl.pallas_call(
        _rnn_cell_kernel,
        out_shape=jax.ShapeDtypeStruct((n_pad, hp), jnp.bfloat16),
        grid_spec=pltpu.PrefetchScalarGridSpec(
            num_scalar_prefetch=0,
            grid=grid,
            in_specs=[
                # activations: change with the (inner) batch tile only
                pl.BlockSpec((tm_eff, ip), lambda j, i: (i, 0)),
                pl.BlockSpec((tm_eff, hk), lambda j, i: (i, 0)),
                # weight slabs: depend only on the (outer) hidden tile ->
                # VMEM-resident across the whole inner batch sweep
                pl.BlockSpec((ip, tn_eff), lambda j, i: (0, j)),
                pl.BlockSpec((hk, tn_eff), lambda j, i: (0, j)),
                # threshold row (bias folded in)
                pl.BlockSpec((1, tn_eff), lambda j, i: (0, j)),
            ],
            out_specs=pl.BlockSpec((tm_eff, tn_eff), lambda j, i: (i, j)),
        ),
        compiler_params=pltpu.CompilerParams(
            # outer hidden axis parallel -> v7x dual-TC shards the weight slab
            dimension_semantics=("parallel", "parallel"),
            vmem_limit_bytes=vmem_limit,
        ),
    )(x, h, w_ih_t, w_hh_t, thr)

    # Strip batch padding and the lane padding of the hidden dim.
    return out[:n, :hidden_size]


def init_params(key, input_size, hidden_size):
    """Deterministic init matching nn.init.uniform_(-sqrt_k, sqrt_k), k=1/hidden."""
    sqrt_k = math.sqrt(1.0 / hidden_size)
    k1, k2, k3, k4 = jax.random.split(key, 4)
    w_ih = jax.random.uniform(k1, (hidden_size, input_size), jnp.float32, -sqrt_k, sqrt_k)
    w_hh = jax.random.uniform(k2, (hidden_size, hidden_size), jnp.float32, -sqrt_k, sqrt_k)
    b_ih = jax.random.uniform(k3, (hidden_size,), jnp.float32, -sqrt_k, sqrt_k)
    b_hh = jax.random.uniform(k4, (hidden_size,), jnp.float32, -sqrt_k, sqrt_k)
    return w_ih, w_hh, b_ih, b_hh


if __name__ == "__main__":
    batch = 8
    input_size = 16
    hidden_size = 32

    key = jax.random.PRNGKey(0)
    kx, kh, kp = jax.random.split(key, 3)
    x = jax.random.normal(kx, (batch, input_size), jnp.float32)
    # previous-step spikes as the hidden state (exercises the W_hh path too)
    h = jax.random.bernoulli(kh, 0.5, (batch, hidden_size)).astype(jnp.float32)

    w_ih, w_hh, b_ih, b_hh = init_params(kp, input_size, hidden_size)

    # One-time param prep (transpose / pad / bias-fold), then the fused kernel.
    w_ih_t, w_hh_t, thr, hid = prepare_params(w_ih, w_hh, b_ih, b_hh)
    out = spiking_vanilla_rnn_cell(x, h, w_ih_t, w_hh_t, thr, hid)
    out = jax.block_until_ready(out)
    out_f32 = out.astype(jnp.float32)

    # Pure-JAX f32 reference of the forward semantics.
    z_ref = x @ w_ih.T + b_ih + h @ w_hh.T + b_hh
    ref = (z_ref >= 0.0).astype(jnp.float32)

    assert out.shape == (batch, hidden_size)
    assert out.dtype == jnp.bfloat16
    # Output must be binary spikes (0/1 is exactly representable in bf16).
    assert bool(jnp.all((out_f32 == 0.0) | (out_f32 == 1.0)))
    # bf16 MXU operands can flip spikes only when z is essentially at the
    # threshold; require exact agreement wherever |z| is clearly away from 0.
    decided = jnp.abs(z_ref) > 5e-2
    assert bool(jnp.all(jnp.where(decided, out_f32 == ref, True)))
    print("KERNEL_OK")
</pallas_src>

<mosaic_0001>
module attributes {stable_mosaic.version = 11 : i64} {
  func.func @_rnn_cell_kernel(%arg0: i32, %arg1: i32, %arg2: memref<16x16xbf16, #tpu.memory_space<vmem>>, %arg3: memref<16x32xbf16, #tpu.memory_space<vmem>>, %arg4: memref<16x128xbf16, #tpu.memory_space<vmem>>, %arg5: memref<32x128xbf16, #tpu.memory_space<vmem>>, %arg6: memref<1x128xf32, #tpu.memory_space<vmem>>, %arg7: memref<16x128xbf16, #tpu.memory_space<vmem>>) attributes {dimension_semantics = [#tpu.dimension_semantics<parallel>, #tpu.dimension_semantics<parallel>], iteration_bounds = array<i64: 1, 1>, scalar_prefetch = 0 : i64, scratch_operands = 0 : i64, tpu.core_type = #tpu.core_type<tc>, window_params = [{transform_indices = @transform_0, window_bounds = array<i64: 16, 16>}, {transform_indices = @transform_1, window_bounds = array<i64: 16, 32>}, {transform_indices = @transform_2, window_bounds = array<i64: 16, 128>}, {transform_indices = @transform_3, window_bounds = array<i64: 32, 128>}, {transform_indices = @transform_4, window_bounds = array<i64: 1, 128>}, {transform_indices = @transform_5, window_bounds = array<i64: 16, 128>}]} {
    %c0 = arith.constant 0 : index
    %c0_0 = arith.constant 0 : index
    %0 = vector.load %arg2[%c0, %c0_0] : memref<16x16xbf16, #tpu.memory_space<vmem>>, vector<16x16xbf16>
    %c0_1 = arith.constant 0 : index
    %c0_2 = arith.constant 0 : index
    %1 = vector.load %arg4[%c0_1, %c0_2] : memref<16x128xbf16, #tpu.memory_space<vmem>>, vector<16x128xbf16>
    %cst = arith.constant dense<0.000000e+00> : vector<16x128xf32>
    %2 = tpu.matmul %0, %1, %cst {dimension_numbers = #tpu.dot_dimension_numbers<[1], [0], [0], [1], [0, 0, 1, 1], [], []>} : vector<16x16xbf16>, vector<16x128xbf16>, vector<16x128xf32> -> vector<16x128xf32>
    %c0_3 = arith.constant 0 : index
    %c0_4 = arith.constant 0 : index
    %3 = vector.load %arg3[%c0_3, %c0_4] : memref<16x32xbf16, #tpu.memory_space<vmem>>, vector<16x32xbf16>
    %c0_5 = arith.constant 0 : index
    %c0_6 = arith.constant 0 : index
    %4 = vector.load %arg5[%c0_5, %c0_6] : memref<32x128xbf16, #tpu.memory_space<vmem>>, vector<32x128xbf16>
    %cst_7 = arith.constant dense<0.000000e+00> : vector<16x128xf32>
    %5 = tpu.matmul %3, %4, %cst_7 {dimension_numbers = #tpu.dot_dimension_numbers<[1], [0], [0], [1], [0, 0, 1, 1], [], []>} : vector<16x32xbf16>, vector<32x128xbf16>, vector<16x128xf32> -> vector<16x128xf32>
    %6 = arith.addf %2, %5 : vector<16x128xf32>
    %c0_8 = arith.constant 0 : index
    %c0_9 = arith.constant 0 : index
    %7 = vector.load %arg6[%c0_8, %c0_9] : memref<1x128xf32, #tpu.memory_space<vmem>>, vector<1x128xf32>
    %8 = vector.broadcast %7 : vector<1x128xf32> to vector<16x128xf32>
    %9 = arith.cmpf oge, %6, %8 : vector<16x128xf32>
    %10 = arith.extui %9 : vector<16x128xi1> to vector<16x128xi32>
    %11 = arith.sitofp %10 : vector<16x128xi32> to vector<16x128xf32>
    %12 = arith.truncf %11 : vector<16x128xf32> to vector<16x128xbf16>
    %c0_10 = arith.constant 0 : index
    %c0_11 = arith.constant 0 : index
    %13 = vector.load %arg7[%c0_10, %c0_11] : memref<16x128xbf16, #tpu.memory_space<vmem>>, vector<16x128xbf16>
    tpu.vector_store %arg7[%c0_10, %c0_11], %12 {strides = array<i32>} : memref<16x128xbf16, #tpu.memory_space<vmem>>, vector<16x128xbf16>,
    return
  }
  func.func @transform_0(%arg0: i32, %arg1: i32) -> (i32, i32) {
    %c0_i32 = arith.constant 0 : i32
    %c0_i32_0 = arith.constant 0 : i32
    return %arg1, %c0_i32 : i32, i32
  }
  func.func @transform_1(%arg0: i32, %arg1: i32) -> (i32, i32) {
    %c0_i32 = arith.constant 0 : i32
    %c0_i32_0 = arith.constant 0 : i32
    return %arg1, %c0_i32 : i32, i32
  }
  func.func @transform_2(%arg0: i32, %arg1: i32) -> (i32, i32) {
    %c0_i32 = arith.constant 0 : i32
    %c0_i32_0 = arith.constant 0 : i32
    return %c0_i32, %arg0 : i32, i32
  }
  func.func @transform_3(%arg0: i32, %arg1: i32) -> (i32, i32) {
    %c0_i32 = arith.constant 0 : i32
    %c0_i32_0 = arith.constant 0 : i32
    return %c0_i32, %arg0 : i32, i32
  }
  func.func @transform_4(%arg0: i32, %arg1: i32) -> (i32, i32) {
    %c0_i32 = arith.constant 0 : i32
    %c0_i32_0 = arith.constant 0 : i32
    return %c0_i32, %arg0 : i32, i32
  }
  func.func @transform_5(%arg0: i32, %arg1: i32) -> (i32, i32) {
    %c0_i32 = arith.constant 0 : i32
    return %arg1, %arg0 : i32, i32
  }
}

</mosaic_0001>

<llo_original>
// kernel: tpu_custom_call.1
$region0: #{tpu_custom_call.1}
  #allocation0 [shape = 'u32[]', space=smem, size = 0x4, offset = 0x4, fixed_abs, tag = 'smem constant byte address 0x4 - core index']
  #allocation1 [shape = 'u32[144,128]{1,0:T(1,128)}', space=vmem, size = 0x12000, scoped, tag = 'internal scratch']
  %s0 = inlined_call_operand.hbm [shape: bf16[16,16], index: 0, kind: input, shape index: {}]
  %s1 = inlined_call_operand.hbm [shape: bf16[16,32], index: 1, kind: input, shape index: {}]
  %s2 = inlined_call_operand.hbm [shape: bf16[16,128], index: 2, kind: input, shape index: {}]
  %s3 = inlined_call_operand.hbm [shape: bf16[32,128], index: 3, kind: input, shape index: {}]
  %s4 = inlined_call_operand.vmem [shape: f32[1,128], index: 4, kind: input, shape index: {}]
  %s5 = inlined_call_operand.hbm [shape: bf16[16,128], index: 5, kind: output, shape index: {}]
  %s6 = sld [smem:[#allocation0]]
  $region46: #{tpu_custom_call.1} parent=0
    _
  %s8 = ssub.s32 1, %s6
  %s9 = scalar_select 0, %s8, %s6
  $region1: #{tpu_custom_call.1} parent=0
    #allocation2 [shape = 'u8[4096]{0}', space=vmem, size = 0x1000, scoped, tag = 'input window, operand 0, single buffered']
    #allocation3 [shape = 's32[1]{0}', space=sflag, size = 0x4, scoped, tag = 'scoped memory for tpu_custom_call.1']
    #allocation4 [shape = 's32[1]{0}', space=sflag, size = 0x4, scoped, tag = 'scoped memory for tpu_custom_call.1']
    #allocation5 [shape = 'u8[4096]{0}', space=vmem, size = 0x1000, scoped, tag = 'input window, operand 1, single buffered']
    #allocation6 [shape = 's32[1]{0}', space=sflag, size = 0x4, scoped, tag = 'scoped memory for tpu_custom_call.1']
    #allocation7 [shape = 'u8[4096]{0}', space=vmem, size = 0x1000, scoped, tag = 'input window, operand 2, single buffered']
    #allocation8 [shape = 'u8[8192]{0}', space=vmem, size = 0x2000, scoped, tag = 'input window, operand 3, single buffered']
    #allocation9 [shape = 's32[1]{0}', space=sflag, size = 0x4, scoped, tag = 'scoped memory for tpu_custom_call.1']
    #allocation10 [shape = 'u8[4096]{0}', space=vmem, size = 0x1000, scoped, tag = 'output window, operand 0, single buffered']
    %10 = vsyncpa [#allocation3], 0
    %11 = vsyncpa [#allocation6], 0
    %12 = vsyncpa [#allocation9], 0
    %13 = vsyncpa [#allocation4], 0
    // Predicated region
    $region2: #{tpu_custom_call.1} parent=1 // pred_check
      _
    $region3: #{tpu_custom_call.1} parent=1 // pred_check_branch
      %15 = sbr.rel (0) target = $region5
    $region4: #{tpu_custom_call.1} parent=1 // pred_region
      %s17 = ssub.s32 128, 128
      %18 = vsyncadd [#allocation3], %s17
      %s19 = sshll.u32 [#allocation2], 4
      %s20 = int_to_ptr.vmem [resolvable:$true] %s19
      %25 = dma.hbm_to_vmem [thread:$0]  %s0, 128, %s20, [#allocation3], 64, 64, 4
    $region5: #{tpu_custom_call.1} parent=1 // pred_fallthru
      _
    // Predicated region
    $region6: #{tpu_custom_call.1} parent=1 // pred_check
      _
    $region7: #{tpu_custom_call.1} parent=1 // pred_check_branch
      %27 = sbr.rel (0) target = $region9
    $region8: #{tpu_custom_call.1} parent=1 // pred_region
      %s29 = ssub.s32 128, 128
      %30 = vsyncadd [#allocation6], %s29
      %s31 = sshll.u32 [#allocation5], 4
      %s32 = int_to_ptr.vmem [resolvable:$true] %s31
      %37 = dma.hbm_to_vmem [thread:$0]  %s1, 128, %s32, [#allocation6], 64, 64, 4
    $region9: #{tpu_custom_call.1} parent=1 // pred_fallthru
      _
    // Predicated region
    $region10: #{tpu_custom_call.1} parent=1 // pred_check
      _
    $region11: #{tpu_custom_call.1} parent=1 // pred_check_branch
      %39 = sbr.rel (0) target = $region13
    $region12: #{tpu_custom_call.1} parent=1 // pred_region
      %s41 = ssub.s32 128, 128
      %42 = vsyncadd [#allocation6], %s41
      %s43 = sshll.u32 [#allocation7], 4
      %s44 = int_to_ptr.vmem [resolvable:$true] %s43
      %49 = dma.hbm_to_vmem [thread:$0]  %s2, 128, %s44, [#allocation6], 64, 64, 4
    $region13: #{tpu_custom_call.1} parent=1 // pred_fallthru
      _
    // Predicated region
    $region14: #{tpu_custom_call.1} parent=1 // pred_check
      _
    $region15: #{tpu_custom_call.1} parent=1 // pred_check_branch
      %51 = sbr.rel (0) target = $region17
    $region16: #{tpu_custom_call.1} parent=1 // pred_region
      %s53 = ssub.s32 256, 256
      %54 = vsyncadd [#allocation9], %s53
      %s55 = sshll.u32 [#allocation8], 4
      %s56 = int_to_ptr.vmem [resolvable:$true] %s55
      %61 = dma.hbm_to_vmem [thread:$0]  %s3, 256, %s56, [#allocation9], 64, 64, 4
    $region17: #{tpu_custom_call.1} parent=1 // pred_fallthru
      _
    // Predicated region
    $region18: #{tpu_custom_call.1} parent=1 // pred_check
      _
    $region19: #{tpu_custom_call.1} parent=1 // pred_check_branch
      %63 = sbr.rel (0) target = $region21
    $region20: #{tpu_custom_call.1} parent=1 // pred_region
      _
    $region21: #{tpu_custom_call.1} parent=1 // pred_fallthru
      _
    // Predicated region
    $region22: #{tpu_custom_call.1} parent=1 // pred_check
      _
    $region23: #{tpu_custom_call.1} parent=1 // pred_check_branch
      %65 = sbr.rel (0) target = $region25
    $region24: #{tpu_custom_call.1} parent=1 // pred_region
      %66 = dma.done [#allocation3], 128
    $region25: #{tpu_custom_call.1} parent=1 // pred_fallthru
      _
    // Predicated region
    $region26: #{tpu_custom_call.1} parent=1 // pred_check
      _
    $region27: #{tpu_custom_call.1} parent=1 // pred_check_branch
      %68 = sbr.rel (0) target = $region29
    $region28: #{tpu_custom_call.1} parent=1 // pred_region
      %69 = dma.done [#allocation6], 128
    $region29: #{tpu_custom_call.1} parent=1 // pred_fallthru
      _
    // Predicated region
    $region30: #{tpu_custom_call.1} parent=1 // pred_check
      _
    $region31: #{tpu_custom_call.1} parent=1 // pred_check_branch
      %71 = sbr.rel (0) target = $region33
    $region32: #{tpu_custom_call.1} parent=1 // pred_region
      %72 = dma.done [#allocation6], 128
    $region33: #{tpu_custom_call.1} parent=1 // pred_fallthru
      _
    // Predicated region
    $region34: #{tpu_custom_call.1} parent=1 // pred_check
      _
    $region35: #{tpu_custom_call.1} parent=1 // pred_check_branch
      %74 = sbr.rel (0) target = $region37
    $region36: #{tpu_custom_call.1} parent=1 // pred_region
      %75 = dma.done [#allocation9], 256
    $region37: #{tpu_custom_call.1} parent=1 // pred_fallthru
      _
    %v77 = vld [vmem:[#allocation2] sm:$0xf]
    %v78 = vld [vmem:[#allocation2 + $0x4] sm:$0xf]
    %v79 = vld [vmem:[#allocation7] sm:$0xf]
    %v80 = vld [vmem:[#allocation7 + $0x4] sm:$0xf]
    %v81 = vld [vmem:[#allocation5] sm:$0xf]
    %v82 = vld [vmem:[#allocation5 + $0x4] sm:$0xf]
    %v83 = vld [vmem:[#allocation8] sm:$0xf]
    %v84 = vld [vmem:[#allocation8 + $0x4] sm:$0xf]
    %v85 = vld [vmem:[#allocation8 + $0x8] sm:$0xf]
    %v86 = vld [vmem:[#allocation8 + $0xc] sm:$0xf]
    %v89 = vunpack.c.l.b16 %v81
    %v90 = vunpack.c.l.b16 %v82
    %v91 = vpack.c.b16 %v90, %v89
    %v96 = vunpack.c.l.b16 %v83
    %v97 = vunpack.c.l.b16 %v84
    %v98 = vunpack.c.l.b16 %v85
    %v99 = vunpack.c.l.b16 %v86
    %v100 = vpack.c.b16 %v97, %v96
    %v101 = vpack.c.b16 %v99, %v98
    %vm104 = vcmask 261120
    %v106 = vsel %vm104, %v91, 0
    %108 = vmatprep.subr.bf16.mxu0 0
    %109 = vmatpush1.bf16.msra.mxu0 %v100
    %110 = vmatprep.subr.bf16.mxu0 0
    %111 = vmatpush1.bf16.msra.mxu0 %v101
    %112 = vmatprep.subr.bf16.mxu0 0
    %113 = vmatpush1.bf16.msra.mxu0 0
    %114 = vmatprep.subr.bf16.mxu0 0
    %115 = vmatpush1.bf16.msra.mxu0 0
    %116 = vmatprep.subr.bf16.mxu0 0
    %117 = vmatpush1.bf16.msra.mxu0 0
    %118 = vmatprep.subr.bf16.mxu0 0
    %119 = vmatpush1.bf16.msra.mxu0 0
    %120 = vmatprep.subr.bf16.mxu0 0
    %121 = vmatpush1.bf16.msra.mxu0 0
    %122 = vmatprep.subr.bf16.mxu0 0
    %123 = vmatpush1.bf16.msra.mxu0 0
    %124 = vmatprep.subr.bf16.mxu0 0
    %125 = vmatpush1.bf16.msra.mxu0 0
    %126 = vmatprep.subr.bf16.mxu0 0
    %127 = vmatpush1.bf16.msra.mxu0 0
    %128 = vmatprep.subr.bf16.mxu0 0
    %129 = vmatpush1.bf16.msra.mxu0 0
    %130 = vmatprep.subr.bf16.mxu0 0
    %131 = vmatpush1.bf16.msra.mxu0 0
    %132 = vmatprep.subr.bf16.mxu0 0
    %133 = vmatpush1.bf16.msra.mxu0 0
    %134 = vmatprep.subr.bf16.mxu0 0
    %135 = vmatpush1.bf16.msra.mxu0 0
    %136 = vmatprep.subr.bf16.mxu0 0
    %137 = vmatpush1.bf16.msra.mxu0 0
    %138 = vmatprep.subr.bf16.mxu0 0
    %139 = vmatpush1.bf16.msra.mxu0 0
    %140 = vmatprep.mubr.bf16.mxu0 0
    %141 = vmatmul.mubr.bf16.gmra.mrb[0].mxu0 %v106
    %v142 = vpop.f32.mrb[0].mxu0
    %v143 = vadd.f32 0.0, %v142
    %v144 = vpop.f32.mrb[0].mxu0
    %v145 = vpop.f32.mrb[0].mxu0
    %v146 = vadd.f32 0.0, %v145
    %v147 = vpop.f32.mrb[0].mxu0
    %148 = vdwg.mxu0
    %v151 = vunpack.c.l.b16 %v77
    %v152 = vunpack.c.l.b16 %v78
    %v153 = vpack.c.b16 %v152, %v151
    %v156 = vunpack.c.l.b16 %v79
    %v157 = vunpack.c.l.b16 %v80
    %v158 = vpack.c.b16 %v157, %v156
    %vm160 = vcmask 130048
    %v162 = vsel %vm160, %v153, 0
    %164 = vmatprep.subr.bf16.mxu0 0
    %165 = vmatpush1.bf16.msra.mxu0 %v158
    %166 = vmatprep.subr.bf16.mxu0 0
    %167 = vmatpush1.bf16.msra.mxu0 0
    %168 = vmatprep.subr.bf16.mxu0 0
    %169 = vmatpush1.bf16.msra.mxu0 0
    %170 = vmatprep.subr.bf16.mxu0 0
    %171 = vmatpush1.bf16.msra.mxu0 0
    %172 = vmatprep.subr.bf16.mxu0 0
    %173 = vmatpush1.bf16.msra.mxu0 0
    %174 = vmatprep.subr.bf16.mxu0 0
    %175 = vmatpush1.bf16.msra.mxu0 0
    %176 = vmatprep.subr.bf16.mxu0 0
    %177 = vmatpush1.bf16.msra.mxu0 0
    %178 = vmatprep.subr.bf16.mxu0 0
    %179 = vmatpush1.bf16.msra.mxu0 0
    %180 = vmatprep.subr.bf16.mxu0 0
    %181 = vmatpush1.bf16.msra.mxu0 0
    %182 = vmatprep.subr.bf16.mxu0 0
    %183 = vmatpush1.bf16.msra.mxu0 0
    %184 = vmatprep.subr.bf16.mxu0 0
    %185 = vmatpush1.bf16.msra.mxu0 0
    %186 = vmatprep.subr.bf16.mxu0 0
    %187 = vmatpush1.bf16.msra.mxu0 0
    %188 = vmatprep.subr.bf16.mxu0 0
    %189 = vmatpush1.bf16.msra.mxu0 0
    %190 = vmatprep.subr.bf16.mxu0 0
    %191 = vmatpush1.bf16.msra.mxu0 0
    %192 = vmatprep.subr.bf16.mxu0 0
    %193 = vmatpush1.bf16.msra.mxu0 0
    %194 = vmatprep.subr.bf16.mxu0 0
    %195 = vmatpush1.bf16.msra.mxu0 0
    %196 = vmatprep.mubr.bf16.mxu0 0
    %197 = vmatmul.mubr.bf16.gmra.mrb[0].mxu0 %v162
    %v198 = vpop.f32.mrb[0].mxu0
    %v199 = vadd.f32 %v143, %v198
    %v200 = vpop.f32.mrb[0].mxu0
    %v201 = vpop.f32.mrb[0].mxu0
    %v202 = vadd.f32 %v146, %v201
    %v203 = vpop.f32.mrb[0].mxu0
    %204 = vdwg.mxu0
    %v205 = vld [vmem:[%s4] sm:$0x1]
    %v207 = vlaneseq
    %v208 = vshrl.u32 %v207, 7
    %v209 = vsub.s32 0, %v208
    %v210 = vrot.slane %v205, %v209
    %vm212 = vcmp.ge.f32.partialorder %v199, %v210
    %vm213 = vcmp.ge.f32.partialorder %v202, %v210
    %v214 = vsel %vm212, 1, 0
    %v215 = vsel %vm213, 1, 0
    %v216 = vcvt.s32.f32 %v214
    %v217 = vcvt.s32.f32 %v215
    %v218 = vpack.c.bf16 %v217, %v216
    %v220 = vunpack.c.l.b16 %v218
    %v221 = vunpack.c.h.b16 %v218
    %v222 = vpack.c.b16 %v220, %v220
    %v223 = vpack.c.b16 %v221, %v221
    %226 = vst [vmem:[#allocation10] sm:$0xf] %v222
    %227 = vst [vmem:[#allocation10 + $0x4] sm:$0xf] %v223
    // Predicated region
    $region38: #{tpu_custom_call.1} parent=1 // pred_check
      _
    $region39: #{tpu_custom_call.1} parent=1 // pred_check_branch
      %229 = sbr.rel (0) target = $region41
    $region40: #{tpu_custom_call.1} parent=1 // pred_region
      %s231 = ssub.s32 128, 128
      %232 = vsyncadd [#allocation4], %s231
      %s233 = sshll.u32 [#allocation10], 4
      %s234 = int_to_ptr.vmem [resolvable:$true] %s233
      %239 = dma.vmem_to_hbm [thread:$0]  %s234, 128, %s5, [#allocation4], 64, 64, 4
    $region41: #{tpu_custom_call.1} parent=1 // pred_fallthru
      _
    // Predicated region
    $region42: #{tpu_custom_call.1} parent=1 // pred_check
      _
    $region43: #{tpu_custom_call.1} parent=1 // pred_check_branch
      %241 = sbr.rel (0) target = $region45
    $region44: #{tpu_custom_call.1} parent=1 // pred_region
      %242 = dma.done [#allocation4], 128
    $region45: #{tpu_custom_call.1} parent=1 // pred_fallthru
      _
    %243 = vsyncpa [#allocation3], 1
    %244 = vsyncpa [#allocation6], 1
    %245 = vsyncpa [#allocation9], 1
    %246 = vsyncpa [#allocation4], 1

</llo_original>
